<compile_context>
chip_gen: v5e
topology: v5e:2x2
jax: 0.10.0
libtpu: 0.0.40
codegen_flags: <defaults>
</compile_context>

<pallas_src>
import functools

import jax
import jax.numpy as jnp
import numpy as np
from jax.experimental import pallas as pl
from jax.experimental.pallas import tpu as pltpu


def _round_up(a: int, b: int) -> int:
    return (a + b - 1) // b * b


# ----------------------------------------------------------------------------
# Kernel
# ----------------------------------------------------------------------------
def _pair_clf_kernel(x_ref, mrow_ref, mcol_ref, w_ref, b_ref,
                     logits_ref, preds_ref, *, h_chunk):
    """One (batch, i-tile) grid step.

    x_ref:      (1, TI, S, H)  pair embeddings, native dtype (f32 / bf16)
    mrow_ref:   (1, TI, 1)     int32 segment mask for the rows of this i-tile
    mcol_ref:   (1, 1, S)      int32 segment mask for all columns
    w_ref:      (1, H)         f32 Linear(H, 1) weight
    b_ref:      (1, 1)         f32 Linear(H, 1) bias
    logits_ref: (1, TI, S)     f32 output block (also used as the accumulator)
    preds_ref:  (1, TI, 1)     int32 output block (argmax over j)
    """
    TI, S = logits_ref.shape[1], logits_ref.shape[2]
    H = x_ref.shape[3]
    bias = b_ref[0, 0]

    # Accumulate the H-contraction into the logits block, one lane-chunk of the
    # hidden axis at a time.  Only the current chunk is upcast to f32, so the
    # f32 temporaries never exceed TI * S * h_chunk * 8 bytes.
    logits_ref[0] = jnp.zeros((TI, S), jnp.float32)

    def accumulate(h0, size):
        xs = x_ref[0, :, :, pl.ds(h0, size)].astype(jnp.float32)   # (TI, S, size)
        ws = w_ref[:, pl.ds(h0, size)].astype(jnp.float32)         # (1, size)
        logits_ref[0] += jnp.sum(xs * ws, axis=-1)                 # (TI, S)

    n_full = H // h_chunk
    rem = H - n_full * h_chunk
    if n_full == 1:
        accumulate(0, h_chunk)
    elif n_full > 1:
        def body(c, carry):
            accumulate(pl.multiple_of(c * h_chunk, h_chunk), h_chunk)
            return carry
        jax.lax.fori_loop(0, n_full, body, 0)
    if rem > 0:
        accumulate(n_full * h_chunk, rem)      # static start / static size

    # A pair (i, j) is valid iff neither segment i nor segment j is padding.
    row_ok = mrow_ref[0] > 0                   # (TI, 1)
    col_ok = mcol_ref[0] > 0                   # (1, S)
    valid = jnp.logical_and(row_ok, col_ok)    # (TI, S)
    logits = jnp.where(valid, logits_ref[0] + bias, -jnp.inf)
    logits_ref[0] = logits

    # argmax over j, first-max-index semantics (matches jnp.argmax; rows that
    # are entirely -inf give index 0).  NaNs are not expected from a Linear.
    col_idx = jax.lax.broadcasted_iota(jnp.int32, (TI, S), 1)
    max_val = jnp.max(logits, axis=-1, keepdims=True)
    cand = jnp.where(logits == max_val, col_idx, jnp.int32(S))
    preds_ref[0] = jnp.min(cand, axis=-1, keepdims=True)           # (TI, 1)


# ----------------------------------------------------------------------------
# Budgeting helpers (generation-aware, padding-aware)
# ----------------------------------------------------------------------------
def _vmem_capacity_bytes(default_bytes: int = 64 << 20) -> int:
    """Physical VMEM per core: 128 MiB on v5e/v6e, 64 MiB on v7x."""
    try:
        return int(pltpu.get_tpu_info().vmem_capacity_bytes)
    except Exception:
        return default_bytes       # conservative (v7x) fallback


def _choose_tiling(B, S, H, itemsize, vmem_cap):
    """Pick the i-tile TI (rows of the first pair axis) and NI = cdiv(S, TI)."""
    sub = 8 * max(1, 4 // itemsize)                 # sublane pack: f32 8, bf16 16
    per_row_x = _round_up(S, sub) * _round_up(H, 128) * itemsize
    sp8 = _round_up(S, 8)

    x_budget = min(24 << 20, vmem_cap // 4)         # double-buffered native x block
    tmp_budget = min(8 << 20, vmem_cap // 8)        # per-chunk f32 temporaries

    ti_x = x_budget // (2 * per_row_x)              # 2x: input double buffer
    ti_tmp = tmp_budget // (sp8 * 128 * 8)          # fits even at the 128-lane chunk
    ti = max(8, min(ti_x, ti_tmp))
    TI = S if ti >= S else max(8, (ti // 8) * 8)    # TI % 8 == 0 unless TI == S
    NI = pl.cdiv(S, TI)

    # v7x has two TensorCores: guarantee >= 2 'parallel' grid steps when possible.
    if B * NI < 2 and S > 8:
        half = _round_up(pl.cdiv(S, 2), 8)
        if half < S:
            TI, NI = half, pl.cdiv(S, half)
    return TI, NI


def _choose_h_chunk(TI, S, H, vmem_cap):
    """Lane-chunk of the hidden axis so per-chunk f32 temps fit the budget."""
    tmp_budget = min(8 << 20, vmem_cap // 8)
    sp8 = _round_up(S, 8)
    max_lanes = max(128, (tmp_budget // (TI * sp8 * 8)) // 128 * 128)
    return int(min(max_lanes, H))


def _vmem_limit_bytes(TI, S, H, itemsize, h_chunk, vmem_cap):
    """Scoped-VMEM limit from the actual buffer sum plus explicit headroom."""
    sub = 8 * max(1, 4 // itemsize)
    hp = _round_up(H, 128)
    sp8, sp128 = _round_up(S, 8), _round_up(S, 128)
    x_block = TI * _round_up(S, sub) * hp * itemsize
    logits_block = TI * sp128 * 4
    preds_block = TI * 128 * 4
    mask_blocks = (TI + 8) * 128 * 4 + 8 * sp128 * 4
    wb_blocks = 8 * hp * 4 + 128 * 4
    temps = TI * sp8 * min(_round_up(h_chunk, 128), hp) * 4 * 2
    needed = (2 * x_block + 2 * logits_block + 2 * preds_block
              + 2 * (mask_blocks + wb_blocks) + temps + (4 << 20))
    return int(min((vmem_cap * 3) // 5, max(16 << 20, needed)))


# ----------------------------------------------------------------------------
# Wrapper
# ----------------------------------------------------------------------------
def pair_clf_forward(x, segment_mask, weight, bias):
    """PairCLF forward.

    x:            (B, S, S, H) pair embeddings (f32 or bf16, streamed as-is)
    segment_mask: (B, S) bool
    weight:       (H,)  nn.Linear(H, 1) weight
    bias:         ()    nn.Linear(H, 1) bias
    returns: logits (B, S, S) f32, preds (B, S) int32
    """
    B, S, S2, H = x.shape
    assert S == S2, "pair embedding must be (B, S, S, H)"
    itemsize = jnp.dtype(x.dtype).itemsize

    vmem_cap = _vmem_capacity_bytes()
    TI, NI = _choose_tiling(B, S, H, itemsize, vmem_cap)
    h_chunk = _choose_h_chunk(TI, S, H, vmem_cap)
    vmem_limit = _vmem_limit_bytes(TI, S, H, itemsize, h_chunk, vmem_cap)

    mask_i32 = segment_mask.astype(jnp.int32)
    mrow = mask_i32.reshape(B, S, 1)          # row view of the one (B, S) mask
    mcol = mask_i32.reshape(B, 1, S)          # column view (both sub-KiB DMAs)
    w = weight.reshape(1, H).astype(jnp.float32)
    b = jnp.asarray(bias, jnp.float32).reshape(1, 1)

    kernel = functools.partial(_pair_clf_kernel, h_chunk=h_chunk)

    # NOTE: if the v7x budget forces a very small per-step x DMA (< ~2 MiB),
    # sweeping pipeline_mode=pl.Buffered(3) on the x spec can add a few %.
    logits, preds = pl.pallas_call(
        kernel,
        out_shape=(jax.ShapeDtypeStruct((B, S, S), jnp.float32),
                   jax.ShapeDtypeStruct((B, S, 1), jnp.int32)),
        grid=(B, NI),
        in_specs=[
            pl.BlockSpec((1, TI, S, H), lambda b_, i_: (b_, i_, 0, 0)),
            pl.BlockSpec((1, TI, 1),    lambda b_, i_: (b_, i_, 0)),
            pl.BlockSpec((1, 1, S),     lambda b_, i_: (b_, 0, 0)),
            pl.BlockSpec((1, H),        lambda b_, i_: (0, 0)),
            pl.BlockSpec((1, 1),        lambda b_, i_: (0, 0)),
        ],
        out_specs=(
            pl.BlockSpec((1, TI, S), lambda b_, i_: (b_, i_, 0)),
            pl.BlockSpec((1, TI, 1), lambda b_, i_: (b_, i_, 0)),
        ),
        compiler_params=pltpu.CompilerParams(
            dimension_semantics=("parallel", "parallel"),
            vmem_limit_bytes=vmem_limit),
    )(x, mrow, mcol, w, b)

    return logits, preds[:, :, 0]


def pair_clf_reference(x, segment_mask, weight, bias):
    logits = jnp.einsum("bijh,h->bij", x.astype(jnp.float32),
                        weight.astype(jnp.float32)) + bias
    valid = segment_mask[:, :, None] & segment_mask[:, None, :]
    logits = jnp.where(valid, logits, -jnp.inf)
    preds = jnp.argmax(logits, axis=-1).astype(jnp.int32)
    return logits, preds


if __name__ == "__main__":
    B, S, H = 2, 8, 32   # batch, num segments (pairs are SxS), hidden size

    key = jax.random.PRNGKey(0)
    kx, kw, kb = jax.random.split(key, 3)

    # Pair embeddings.
    x = jax.random.normal(kx, (B, S, S, H), dtype=jnp.float32)

    # Segment mask: trailing segments are padding.
    segment_mask = jnp.array(
        [[1, 1, 1, 1, 1, 1, 0, 0],
         [1, 1, 1, 0, 0, 0, 0, 0]], dtype=bool)

    # nn.Linear(H, 1) params (uniform +-1/sqrt(H), like torch default init).
    bound = 1.0 / np.sqrt(H)
    weight = jax.random.uniform(kw, (H,), jnp.float32, -bound, bound)
    bias = jax.random.uniform(kb, (), jnp.float32, -bound, bound)

    # --- f32 path: exact comparison against the pure-JAX reference ---------
    logits, preds = pair_clf_forward(x, segment_mask, weight, bias)
    jax.block_until_ready((logits, preds))

    ref_logits, ref_preds = pair_clf_reference(x, segment_mask, weight, bias)
    np.testing.assert_allclose(np.asarray(logits), np.asarray(ref_logits),
                               rtol=1e-5, atol=1e-5)
    np.testing.assert_array_equal(np.asarray(preds), np.asarray(ref_preds))

    # --- bf16 path: x streamed as bf16 (no HBM upcast), f32 math in-kernel --
    x_bf16 = x.astype(jnp.bfloat16)
    logits_bf16, _ = pair_clf_forward(x_bf16, segment_mask, weight, bias)
    jax.block_until_ready(logits_bf16)
    ref_logits_bf16, _ = pair_clf_reference(x_bf16.astype(jnp.float32),
                                            segment_mask, weight, bias)
    np.testing.assert_allclose(np.asarray(logits_bf16),
                               np.asarray(ref_logits_bf16),
                               rtol=1e-3, atol=1e-3)

    print("KERNEL_OK")
</pallas_src>

<mosaic_0001>
module attributes {stable_mosaic.version = 11 : i64} {
  func.func @_pair_clf_kernel(%arg0: i32, %arg1: i32, %arg2: memref<1x8x8x32xf32, #tpu.memory_space<vmem>>, %arg3: memref<1x8x1xi32, #tpu.memory_space<vmem>>, %arg4: memref<1x1x8xi32, #tpu.memory_space<vmem>>, %arg5: memref<1x32xf32, #tpu.memory_space<vmem>>, %arg6: memref<1x1xf32, #tpu.memory_space<vmem>>, %arg7: memref<1x8x8xf32, #tpu.memory_space<vmem>>, %arg8: memref<1x8x1xi32, #tpu.memory_space<vmem>>) attributes {dimension_semantics = [#tpu.dimension_semantics<parallel>, #tpu.dimension_semantics<parallel>], iteration_bounds = array<i64: 2, 1>, scalar_prefetch = 0 : i64, scratch_operands = 0 : i64, tpu.core_type = #tpu.core_type<tc>, window_params = [{transform_indices = @transform_0, window_bounds = array<i64: 1, 8, 8, 32>}, {transform_indices = @transform_1, window_bounds = array<i64: 1, 8, 1>}, {transform_indices = @transform_2, window_bounds = array<i64: 1, 1, 8>}, {pipeline_mode = #tpu.pipeline_mode<synchronous>, transform_indices = @transform_3, window_bounds = array<i64: 1, 32>}, {pipeline_mode = #tpu.pipeline_mode<synchronous>, transform_indices = @transform_4, window_bounds = array<i64: 1, 1>}, {transform_indices = @transform_5, window_bounds = array<i64: 1, 8, 8>}, {transform_indices = @transform_6, window_bounds = array<i64: 1, 8, 1>}]} {
    %c0 = arith.constant 0 : index
    %c0_0 = arith.constant 0 : index
    %0 = vector.load %arg6[%c0, %c0_0] : memref<1x1xf32, #tpu.memory_space<vmem>>, vector<1x1xf32>
    %1 = vector.extract %0[0, 0] : f32 from vector<1x1xf32>
    %cst = arith.constant 0.000000e+00 : f32
    %2 = vector.broadcast %cst : f32 to vector<8x8xf32>
    %c0_1 = arith.constant 0 : index
    %c0_2 = arith.constant 0 : index
    %c0_3 = arith.constant 0 : index
    %3 = vector.load %arg7[%c0_1, %c0_2, %c0_3] : memref<1x8x8xf32, #tpu.memory_space<vmem>>, vector<1x8x8xf32>
    %4 = vector.shape_cast %3 : vector<1x8x8xf32> to vector<8x8xf32>
    %5 = vector.shape_cast %2 : vector<8x8xf32> to vector<1x8x8xf32>
    tpu.vector_store %arg7[%c0_1, %c0_2, %c0_3], %5 {strides = array<i32>} : memref<1x8x8xf32, #tpu.memory_space<vmem>>, vector<1x8x8xf32>,
    %c0_4 = arith.constant 0 : index
    %c0_5 = arith.constant 0 : index
    %c0_6 = arith.constant 0 : index
    %c0_7 = arith.constant 0 : index
    %6 = vector.load %arg2[%c0_4, %c0_5, %c0_6, %c0_7] : memref<1x8x8x32xf32, #tpu.memory_space<vmem>>, vector<1x8x8x32xf32>
    %7 = vector.shape_cast %6 : vector<1x8x8x32xf32> to vector<8x8x32xf32>
    %c0_8 = arith.constant 0 : index
    %c0_9 = arith.constant 0 : index
    %8 = vector.load %arg5[%c0_8, %c0_9] : memref<1x32xf32, #tpu.memory_space<vmem>>, vector<1x32xf32>
    %c0_10 = arith.constant 0 : index
    %c0_11 = arith.constant 0 : index
    %c0_12 = arith.constant 0 : index
    %9 = vector.load %arg7[%c0_10, %c0_11, %c0_12] : memref<1x8x8xf32, #tpu.memory_space<vmem>>, vector<1x8x8xf32>
    %10 = vector.shape_cast %9 : vector<1x8x8xf32> to vector<8x8xf32>
    %11 = vector.shape_cast %8 : vector<1x32xf32> to vector<1x1x32xf32>
    %12 = vector.broadcast %11 : vector<1x1x32xf32> to vector<8x8x32xf32>
    %13 = arith.mulf %7, %12 : vector<8x8x32xf32>
    %cst_13 = arith.constant dense<0.000000e+00> : vector<8x8xf32>
    %14 = vector.multi_reduction <add>, %13, %cst_13 [2] : vector<8x8x32xf32> to vector<8x8xf32>
    %15 = arith.addf %10, %14 : vector<8x8xf32>
    %c0_14 = arith.constant 0 : index
    %c0_15 = arith.constant 0 : index
    %c0_16 = arith.constant 0 : index
    %16 = vector.load %arg7[%c0_14, %c0_15, %c0_16] : memref<1x8x8xf32, #tpu.memory_space<vmem>>, vector<1x8x8xf32>
    %17 = vector.shape_cast %16 : vector<1x8x8xf32> to vector<8x8xf32>
    %18 = vector.shape_cast %15 : vector<8x8xf32> to vector<1x8x8xf32>
    tpu.vector_store %arg7[%c0_14, %c0_15, %c0_16], %18 {strides = array<i32>} : memref<1x8x8xf32, #tpu.memory_space<vmem>>, vector<1x8x8xf32>,
    %c0_17 = arith.constant 0 : index
    %c0_18 = arith.constant 0 : index
    %c0_19 = arith.constant 0 : index
    %19 = vector.load %arg3[%c0_17, %c0_18, %c0_19] : memref<1x8x1xi32, #tpu.memory_space<vmem>>, vector<1x8x1xi32>
    %20 = vector.shape_cast %19 : vector<1x8x1xi32> to vector<8x1xi32>
    %c0_i32 = arith.constant 0 : i32
    %21 = vector.broadcast %c0_i32 : i32 to vector<8x1xi32>
    %22 = arith.cmpi sgt, %20, %21 : vector<8x1xi32>
    %c0_20 = arith.constant 0 : index
    %c0_21 = arith.constant 0 : index
    %c0_22 = arith.constant 0 : index
    %23 = vector.load %arg4[%c0_20, %c0_21, %c0_22] : memref<1x1x8xi32, #tpu.memory_space<vmem>>, vector<1x1x8xi32>
    %24 = vector.shape_cast %23 : vector<1x1x8xi32> to vector<1x8xi32>
    %c0_i32_23 = arith.constant 0 : i32
    %25 = vector.broadcast %c0_i32_23 : i32 to vector<1x8xi32>
    %26 = arith.cmpi sgt, %24, %25 : vector<1x8xi32>
    %27 = vector.broadcast %22 : vector<8x1xi1> to vector<8x8xi1>
    %28 = vector.broadcast %26 : vector<1x8xi1> to vector<8x8xi1>
    %29 = arith.andi %27, %28 : vector<8x8xi1>
    %c0_24 = arith.constant 0 : index
    %c0_25 = arith.constant 0 : index
    %c0_26 = arith.constant 0 : index
    %30 = vector.load %arg7[%c0_24, %c0_25, %c0_26] : memref<1x8x8xf32, #tpu.memory_space<vmem>>, vector<1x8x8xf32>
    %31 = vector.shape_cast %30 : vector<1x8x8xf32> to vector<8x8xf32>
    %32 = vector.broadcast %1 : f32 to vector<8x8xf32>
    %33 = arith.addf %31, %32 : vector<8x8xf32>
    %cst_27 = arith.constant 0xFF800000 : f32
    %34 = vector.broadcast %cst_27 : f32 to vector<8x8xf32>
    %35 = arith.select %29, %33, %34 : vector<8x8xi1>, vector<8x8xf32>
    %c0_28 = arith.constant 0 : index
    %c0_29 = arith.constant 0 : index
    %c0_30 = arith.constant 0 : index
    %36 = vector.load %arg7[%c0_28, %c0_29, %c0_30] : memref<1x8x8xf32, #tpu.memory_space<vmem>>, vector<1x8x8xf32>
    %37 = vector.shape_cast %36 : vector<1x8x8xf32> to vector<8x8xf32>
    %38 = vector.shape_cast %35 : vector<8x8xf32> to vector<1x8x8xf32>
    tpu.vector_store %arg7[%c0_28, %c0_29, %c0_30], %38 {strides = array<i32>} : memref<1x8x8xf32, #tpu.memory_space<vmem>>, vector<1x8x8xf32>,
    %39 = tpu.iota {dimensions = array<i32: 1>} : vector<8x8xi32>
    %cst_31 = arith.constant dense<0xFF800000> : vector<8xf32>
    %40 = vector.multi_reduction <maximumf>, %35, %cst_31 [1] : vector<8x8xf32> to vector<8xf32>
    %41 = vector.shape_cast %40 : vector<8xf32> to vector<8x1xf32>
    %42 = vector.broadcast %41 : vector<8x1xf32> to vector<8x8xf32>
    %43 = arith.cmpf oeq, %35, %42 : vector<8x8xf32>
    %c8_i32 = arith.constant 8 : i32
    %44 = vector.broadcast %c8_i32 : i32 to vector<8x8xi32>
    %45 = arith.select %43, %39, %44 : vector<8x8xi1>, vector<8x8xi32>
    %cst_32 = arith.constant dense<2147483647> : vector<8xi32>
    %46 = vector.multi_reduction <minsi>, %45, %cst_32 [1] : vector<8x8xi32> to vector<8xi32>
    %47 = vector.shape_cast %46 : vector<8xi32> to vector<8x1xi32>
    %c0_33 = arith.constant 0 : index
    %c0_34 = arith.constant 0 : index
    %c0_35 = arith.constant 0 : index
    %48 = vector.load %arg8[%c0_33, %c0_34, %c0_35] : memref<1x8x1xi32, #tpu.memory_space<vmem>>, vector<1x8x1xi32>
    %49 = vector.shape_cast %48 : vector<1x8x1xi32> to vector<8x1xi32>
    %50 = vector.shape_cast %47 : vector<8x1xi32> to vector<1x8x1xi32>
    tpu.vector_store %arg8[%c0_33, %c0_34, %c0_35], %50 {strides = array<i32>} : memref<1x8x1xi32, #tpu.memory_space<vmem>>, vector<1x8x1xi32>,
    return
  }
  func.func @transform_0(%arg0: i32, %arg1: i32) -> (i32, i32, i32, i32) {
    %c0_i32 = arith.constant 0 : i32
    %c0_i32_0 = arith.constant 0 : i32
    %c0_i32_1 = arith.constant 0 : i32
    return %arg0, %arg1, %c0_i32, %c0_i32_0 : i32, i32, i32, i32
  }
  func.func @transform_1(%arg0: i32, %arg1: i32) -> (i32, i32, i32) {
    %c0_i32 = arith.constant 0 : i32
    %c0_i32_0 = arith.constant 0 : i32
    return %arg0, %arg1, %c0_i32 : i32, i32, i32
  }
  func.func @transform_2(%arg0: i32, %arg1: i32) -> (i32, i32, i32) {
    %c0_i32 = arith.constant 0 : i32
    %c0_i32_0 = arith.constant 0 : i32
    %c0_i32_1 = arith.constant 0 : i32
    return %arg0, %c0_i32, %c0_i32_0 : i32, i32, i32
  }
  func.func @transform_3(%arg0: i32, %arg1: i32) -> (i32, i32) {
    %c0_i32 = arith.constant 0 : i32
    %c0_i32_0 = arith.constant 0 : i32
    %c0_i32_1 = arith.constant 0 : i32
    return %c0_i32, %c0_i32_0 : i32, i32
  }
  func.func @transform_4(%arg0: i32, %arg1: i32) -> (i32, i32) {
    %c0_i32 = arith.constant 0 : i32
    %c0_i32_0 = arith.constant 0 : i32
    %c0_i32_1 = arith.constant 0 : i32
    return %c0_i32, %c0_i32_0 : i32, i32
  }
  func.func @transform_5(%arg0: i32, %arg1: i32) -> (i32, i32, i32) {
    %c0_i32 = arith.constant 0 : i32
    %c0_i32_0 = arith.constant 0 : i32
    return %arg0, %arg1, %c0_i32 : i32, i32, i32
  }
  func.func @transform_6(%arg0: i32, %arg1: i32) -> (i32, i32, i32) {
    %c0_i32 = arith.constant 0 : i32
    %c0_i32_0 = arith.constant 0 : i32
    return %arg0, %arg1, %c0_i32 : i32, i32, i32
  }
}

</mosaic_0001>

<llo_original>
// kernel: tpu_custom_call.1
$region0: #{tpu_custom_call.1}
  #allocation0 [shape = 'u32[]', space=smem, size = 0x4, offset = 0x4, fixed_abs, tag = 'smem constant byte address 0x4 - core index']
  #allocation1 [shape = 'u32[72,128]{1,0:T(1,128)}', space=vmem, size = 0x9000, scoped, tag = 'internal scratch']
  #allocation2 [shape = 'f32[1,1]{1,0:T(1,128)S(1)}', space=vmem, size = 0x200, scoped, tag = 'scoped memory for tpu_custom_call.1']
  %s0 = inlined_call_operand.hbm [shape: f32[2,8,8,32], index: 0, kind: input, shape index: {}]
  %s1 = inlined_call_operand.vmem [shape: s32[2,8,1], index: 1, kind: input, shape index: {}]
  %s2 = inlined_call_operand.vmem [shape: s32[2,1,8], index: 2, kind: input, shape index: {}]
  %s3 = inlined_call_operand.vmem [shape: f32[1,32], index: 3, kind: input, shape index: {}]
  %s4 = inlined_call_operand.<no memory space> [shape: f32[1,1], index: 4, kind: input, shape index: {}]
  %s5 = inlined_call_operand.hbm [shape: f32[2,8,8], index: 5, kind: output, shape index: {0}]
  %s6 = inlined_call_operand.vmem [shape: s32[2,8,1], index: 6, kind: output, shape index: {1}]
  %7 = xla_tuple %s5, %s6
  %s8 = sld [smem:[#allocation0]]
  $region65: #{tpu_custom_call.1} parent=0
    _
  %s10 = ssub.s32 1, %s8
  %s11 = scalar_select 0, %s10, %s8
  %v12 = vstv %s4
  %13 = vst [vmem:[#allocation2] sm:$0x1] %v12
  $region1: #{tpu_custom_call.1} parent=0
    #allocation3 [shape = 'u8[65536]{0}', space=vmem, size = 0x10000, scoped, tag = 'input window, operand 0']
    #allocation4 [shape = 's32[2]{0}', space=sflag, size = 0x8, scoped, tag = 'scoped memory for tpu_custom_call.1']
    #allocation5 [shape = 's32[2]{0}', space=sflag, size = 0x8, scoped, tag = 'scoped memory for tpu_custom_call.1']
    #allocation6 [shape = 'u8[8192]{0}', space=vmem, size = 0x2000, scoped, tag = 'output window, operand 0']
    %14 = vsyncpa [#allocation4], 0
    %s15 = scalar_lea.sflag [#allocation4], 1
    %16 = vsyncpa %s15, 0
    %17 = vsyncpa [#allocation5], 0
    %s18 = scalar_lea.sflag [#allocation5], 1
    %19 = vsyncpa %s18, 0
    loop: start=0, step=1, limit=4
    $region2: #{tpu_custom_call.1} parent=1 // loop_pre_header
      _
    $region3: #{tpu_custom_call.1} parent=1 // loop_header
      %s21 = sphi 0, %s25
      %p22 = scmp.ge.s32.totalorder %s21, 4
      %s28 = sphi 0, %s40
      %s29 = sphi 0, %s36
      %s30 = sphi 0, %s28
      %s31 = sphi 0, %s29
      %s32 = sphi 0, %s30
      %s33 = sphi 0, %s31
      %s45 = sphi 0, %s47
      %s48 = sphi 0, %s45
      %s49 = sphi 0, %s48
      %s65 = sphi 0, %s49
      %s73 = sphi 0, %s75
      %s76 = sphi 0, %s73
      %s77 = sphi 0, %s76
      %s93 = sphi 0, %s77
      %s99 = sphi 0, %s101
      %s102 = sphi 0, %s99
      %s103 = sphi 0, %s102
      %s119 = sphi 0, %s103
      %s123 = sphi 0, %s123
      %s125 = sphi 0, %s123
      %s126 = sphi 0, %s125
      %s140 = sphi 0, %s126
      %s144 = sphi 0, %s144
      %s146 = sphi 0, %s144
      %s147 = sphi 0, %s146
      %s161 = sphi 0, %s147
      %s169 = sphi 0, %s171
      %s172 = sphi 0, %s169
      %s173 = sphi 0, %s172
      %s189 = sphi 0, %s173
      %s197 = sphi 0, %s199
      %s200 = sphi 0, %s197
      %s201 = sphi 0, %s200
      %s217 = sphi 0, %s201
    $region4: #{tpu_custom_call.1} parent=1 // loop_header_branch
      %24 = sbr.rel (%p22) target = $region8
    $region5: #{tpu_custom_call.1} parent=1 // loop_body
      %s26 = ssub.s32 %s21, 1
      %s27 = ssub.s32 %s21, 2
      %s34 = sadd.s32 1, %s29
      %p35 = scmp.ge.s32.totalorder %s34, 1
      %s36 = scalar_select %p35, 0, %s34
      %s37 = sadd.s32 1, %s28
      %s38 = scalar_select %p35, %s37, %s28
      %p39 = scmp.ge.s32.totalorder %s38, 2
      %s40 = scalar_select %p39, 0, %s38
      %s41 = ssub.s32 %s28, %s40
      %s42 = ssub.s32 %s29, %s36
      %s43 = sor.u32 %s41, %s42
      %p44 = scmp.eq.s32.totalorder %s43, 0
      %s46 = sadd.s32 %s45, 1
      %s47 = scalar_select %p44, %s45, %s46
      %p50 = pneg %p44
      %p51 = scmp.eq.s32.totalorder %s21, 1
      %p52 = por %p50, %p51
      %p53 = scmp.ne.s32.totalorder %s45, %s48
      %p54 = scmp.eq.s32.totalorder %s21, 0
      %p55 = por %p53, %p54
      %p56 = scmp.ne.s32.totalorder %s45, %s48
      %p57 = scmp.eq.s32.totalorder %s26, 1
      %p58 = por %p56, %p57
      %p59 = scmp.ne.s32.totalorder %s48, %s49
      %p60 = scmp.eq.s32.totalorder %s26, 0
      %p61 = por %p59, %p60
      %p62 = scmp.ne.s32.totalorder %s48, %s49
      %p63 = scmp.eq.s32.totalorder %s27, 1
      %p64 = por %p62, %p63
      %p66 = scmp.ne.s32.totalorder %s49, %s65
      %p67 = scmp.eq.s32.totalorder %s27, 0
      %p68 = por %p66, %p67
      %s69 = ssub.s32 %s28, %s40
      %s70 = ssub.s32 %s29, %s36
      %s71 = sor.u32 %s69, %s70
      %p72 = scmp.eq.s32.totalorder %s71, 0
      %s74 = sadd.s32 %s73, 1
      %s75 = scalar_select %p72, %s73, %s74
      %p78 = pneg %p72
      %p79 = scmp.eq.s32.totalorder %s21, 1
      %p80 = por %p78, %p79
      %p81 = scmp.ne.s32.totalorder %s73, %s76
      %p82 = scmp.eq.s32.totalorder %s21, 0
      %p83 = por %p81, %p82
      %p84 = scmp.ne.s32.totalorder %s73, %s76
      %p85 = scmp.eq.s32.totalorder %s26, 1
      %p86 = por %p84, %p85
      %p87 = scmp.ne.s32.totalorder %s76, %s77
      %p88 = scmp.eq.s32.totalorder %s26, 0
      %p89 = por %p87, %p88
      %p90 = scmp.ne.s32.totalorder %s76, %s77
      %p91 = scmp.eq.s32.totalorder %s27, 1
      %p92 = por %p90, %p91
      %p94 = scmp.ne.s32.totalorder %s77, %s93
      %p95 = scmp.eq.s32.totalorder %s27, 0
      %p96 = por %p94, %p95
      %s97 = ssub.s32 %s28, %s40
      %p98 = scmp.eq.s32.totalorder %s97, 0
      %s100 = sadd.s32 %s99, 1
      %s101 = scalar_select %p98, %s99, %s100
      %p104 = pneg %p98
      %p105 = scmp.eq.s32.totalorder %s21, 1
      %p106 = por %p104, %p105
      %p107 = scmp.ne.s32.totalorder %s99, %s102
      %p108 = scmp.eq.s32.totalorder %s21, 0
      %p109 = por %p107, %p108
      %p110 = scmp.ne.s32.totalorder %s99, %s102
      %p111 = scmp.eq.s32.totalorder %s26, 1
      %p112 = por %p110, %p111
      %p113 = scmp.ne.s32.totalorder %s102, %s103
      %p114 = scmp.eq.s32.totalorder %s26, 0
      %p115 = por %p113, %p114
      %p116 = scmp.ne.s32.totalorder %s102, %s103
      %p117 = scmp.eq.s32.totalorder %s27, 1
      %p118 = por %p116, %p117
      %p120 = scmp.ne.s32.totalorder %s103, %s119
      %p121 = scmp.eq.s32.totalorder %s27, 0
      %p122 = por %p120, %p121
      %s124 = sadd.s32 %s123, 1
      %p127 = scmp.eq.s32.totalorder %s21, 1
      %p128 = scmp.ne.s32.totalorder %s123, %s125
      %p129 = scmp.eq.s32.totalorder %s21, 0
      %p130 = por %p128, %p129
      %p131 = scmp.ne.s32.totalorder %s123, %s125
      %p132 = scmp.eq.s32.totalorder %s26, 1
      %p133 = por %p131, %p132
      %p134 = scmp.ne.s32.totalorder %s125, %s126
      %p135 = scmp.eq.s32.totalorder %s26, 0
      %p136 = por %p134, %p135
      %p137 = scmp.ne.s32.totalorder %s125, %s126
      %p138 = scmp.eq.s32.totalorder %s27, 1
      %p139 = por %p137, %p138
      %p141 = scmp.ne.s32.totalorder %s126, %s140
      %p142 = scmp.eq.s32.totalorder %s27, 0
      %p143 = por %p141, %p142
      %s145 = sadd.s32 %s144, 1
      %p148 = scmp.eq.s32.totalorder %s21, 1
      %p149 = scmp.ne.s32.totalorder %s144, %s146
      %p150 = scmp.eq.s32.totalorder %s21, 0
      %p151 = por %p149, %p150
      %p152 = scmp.ne.s32.totalorder %s144, %s146
      %p153 = scmp.eq.s32.totalorder %s26, 1
      %p154 = por %p152, %p153
      %p155 = scmp.ne.s32.totalorder %s146, %s147
      %p156 = scmp.eq.s32.totalorder %s26, 0
      %p157 = por %p155, %p156
      %p158 = scmp.ne.s32.totalorder %s146, %s147
      %p159 = scmp.eq.s32.totalorder %s27, 1
      %p160 = por %p158, %p159
      %p162 = scmp.ne.s32.totalorder %s147, %s161
      %p163 = scmp.eq.s32.totalorder %s27, 0
      %p164 = por %p162, %p163
      %s165 = ssub.s32 %s28, %s40
      %s166 = ssub.s32 %s29, %s36
      %s167 = sor.u32 %s165, %s166
      %p168 = scmp.eq.s32.totalorder %s167, 0
      %s170 = sadd.s32 %s169, 1
      %s171 = scalar_select %p168, %s169, %s170
      %p174 = pneg %p168
      %p175 = scmp.eq.s32.totalorder %s21, 1
      %p176 = por %p174, %p175
      %p177 = scmp.ne.s32.totalorder %s169, %s172
      %p178 = scmp.eq.s32.totalorder %s21, 0
      %p179 = por %p177, %p178
      %p180 = scmp.ne.s32.totalorder %s169, %s172
      %p181 = scmp.eq.s32.totalorder %s26, 1
      %p182 = por %p180, %p181
      %p183 = scmp.ne.s32.totalorder %s172, %s173
      %p184 = scmp.eq.s32.totalorder %s26, 0
      %p185 = por %p183, %p184
      %p186 = scmp.ne.s32.totalorder %s172, %s173
      %p187 = scmp.eq.s32.totalorder %s27, 1
      %p188 = por %p186, %p187
      %p190 = scmp.ne.s32.totalorder %s173, %s189
      %p191 = scmp.eq.s32.totalorder %s27, 0
      %p192 = por %p190, %p191
      %s193 = ssub.s32 %s28, %s40
      %s194 = ssub.s32 %s29, %s36
      %s195 = sor.u32 %s193, %s194
      %p196 = scmp.eq.s32.totalorder %s195, 0
      %s198 = sadd.s32 %s197, 1
      %s199 = scalar_select %p196, %s197, %s198
      %p202 = pneg %p196
      %p203 = scmp.eq.s32.totalorder %s21, 1
      %p204 = por %p202, %p203
      %p205 = scmp.ne.s32.totalorder %s197, %s200
      %p206 = scmp.eq.s32.totalorder %s21, 0
      %p207 = por %p205, %p206
      %p208 = scmp.ne.s32.totalorder %s197, %s200
      %p209 = scmp.eq.s32.totalorder %s26, 1
      %p210 = por %p208, %p209
      %p211 = scmp.ne.s32.totalorder %s200, %s201
      %p212 = scmp.eq.s32.totalorder %s26, 0
      %p213 = por %p211, %p212
      %p214 = scmp.ne.s32.totalorder %s200, %s201
      %p215 = scmp.eq.s32.totalorder %s27, 1
      %p216 = por %p214, %p215
      %p218 = scmp.ne.s32.totalorder %s201, %s217
      %p219 = scmp.eq.s32.totalorder %s27, 0
      %p220 = por %p218, %p219
      %p221 = scmp.le.s32.totalorder 1, %s21
      %p222 = scmp.lt.s32.totalorder %s21, 3
      %p223 = pnand %p221, %p222
      %p224 = pneg %p223
      // Predicated region
      $region9: #{tpu_custom_call.1} parent=5 // pred_check
        _
      $region10: #{tpu_custom_call.1} parent=5 // pred_check_branch
        %226 = sbr.rel (%p223) target = $region12
      $region11: #{tpu_custom_call.1} parent=5 // pred_region
        %s227 = ssub.s32 %s21, 1
        // Predicated region
        $region13: #{tpu_custom_call.1} parent=11 // pred_check
          %p228 = pneg %p136
        $region14: #{tpu_custom_call.1} parent=11 // pred_check_branch
          %230 = sbr.rel (%p228) target = $region16
        $region15: #{tpu_custom_call.1} parent=11 // pred_region
          _
        $region16: #{tpu_custom_call.1} parent=11 // pred_fallthru
          _
        // Predicated region
        $region17: #{tpu_custom_call.1} parent=11 // pred_check
          %p231 = pneg %p157
        $region18: #{tpu_custom_call.1} parent=11 // pred_check_branch
          %233 = sbr.rel (%p231) target = $region20
        $region19: #{tpu_custom_call.1} parent=11 // pred_region
          _
        $region20: #{tpu_custom_call.1} parent=11 // pred_fallthru
          _
      $region12: #{tpu_custom_call.1} parent=5 // pred_fallthru
        _
      %p234 = scmp.lt.s32.totalorder %s21, 2
      // Predicated region
      $region21: #{tpu_custom_call.1} parent=5 // pred_check
        %p235 = pneg %p234
      $region22: #{tpu_custom_call.1} parent=5 // pred_check_branch
        %237 = sbr.rel (%p235) target = $region24
      $region23: #{tpu_custom_call.1} parent=5 // pred_region
        // Predicated region
        $region25: #{tpu_custom_call.1} parent=23 // pred_check
          %p238 = pneg %p55
        $region26: #{tpu_custom_call.1} parent=23 // pred_check_branch
          %240 = sbr.rel (%p238) target = $region28
        $region27: #{tpu_custom_call.1} parent=23 // pred_region
          %s241 = sand.u32 %s45, 1
          %s242 = scalar_lea.sflag [#allocation4], %s241
          %s243 = sand.u32 %s45, 1
          %s244 = smul.addr %s243, 64
          %s245 = scalar_lea.vmem [#allocation3], %s244
          %s246 = smul.u32 8, %s29
          %248 = vsyncadd %s242, 0
          %s249 = smul.addr %s28, 8
          %s250 = sadd.s32 %s246, %s249
          %s251 = smul.addr %s250, 8
          %s252 = scalar_lea.hbm %s0, %s251
          %s253 = sshll.u32 %s252, 4
          %s254 = int_to_ptr.hbm [resolvable:$true] %s253
          %s255 = sshll.u32 %s245, 4
          %s256 = int_to_ptr.vmem [resolvable:$true] %s255
          %261 = dma.hbm_to_vmem [thread:$0]  %s254, 1024, %s256, %s242, 128, 128, 8
        $region28: #{tpu_custom_call.1} parent=23 // pred_fallthru
          _
        // Predicated region
        $region29: #{tpu_custom_call.1} parent=23 // pred_check
          %p262 = pneg %p83
        $region30: #{tpu_custom_call.1} parent=23 // pred_check_branch
          %264 = sbr.rel (%p262) target = $region32
        $region31: #{tpu_custom_call.1} parent=23 // pred_region
          %p265 = scmp.lt.s32.totalorder %s28, 1
          %s266 = scalar_select %p265, %s28, 1
          %p267 = scmp.lt.s32.totalorder %s29, 0
          %s268 = scalar_select %p267, %s29, 0
          %s269 = sadd.s32 %s268, %s266
          %s270 = smul.addr %s269, 8
          %s271 = scalar_lea.vmem %s1, %s270
        $region32: #{tpu_custom_call.1} parent=23 // pred_fallthru
          _
        // Predicated region
        $region33: #{tpu_custom_call.1} parent=23 // pred_check
          %p272 = pneg %p109
        $region34: #{tpu_custom_call.1} parent=23 // pred_check_branch
          %274 = sbr.rel (%p272) target = $region36
        $region35: #{tpu_custom_call.1} parent=23 // pred_region
          %p275 = scmp.lt.s32.totalorder %s28, 1
          %s276 = scalar_select %p275, %s28, 1
          %s277 = scalar_lea.vmem %s2, %s276
        $region36: #{tpu_custom_call.1} parent=23 // pred_fallthru
          _
      $region24: #{tpu_custom_call.1} parent=5 // pred_fallthru
        _
      %p278 = scmp.le.s32.totalorder 1, %s21
      %p279 = scmp.lt.s32.totalorder %s21, 3
      %p280 = pnand %p278, %p279
      %p281 = pneg %p280
      // Predicated region
      $region37: #{tpu_custom_call.1} parent=5 // pred_check
        _
      $region38: #{tpu_custom_call.1} parent=5 // pred_check_branch
        %283 = sbr.rel (%p280) target = $region40
      $region39: #{tpu_custom_call.1} parent=5 // pred_region
        %s284 = ssub.s32 %s21, 1
        %s285 = sand.u32 %s48, 1
        %s286 = scalar_lea.sflag [#allocation4], %s285
        %s287 = sand.u32 %s48, 1
        %s288 = smul.addr %s287, 64
        %s289 = scalar_lea.vmem [#allocation3], %s288
        // Predicated region
        $region41: #{tpu_custom_call.1} parent=39 // pred_check
          %p290 = pneg %p61
        $region42: #{tpu_custom_call.1} parent=39 // pred_check_branch
          %292 = sbr.rel (%p290) target = $region44
        $region43: #{tpu_custom_call.1} parent=39 // pred_region
          %294 = dma.done %s286, 1024
        $region44: #{tpu_custom_call.1} parent=39 // pred_fallthru
          _
        %s295 = sand.u32 %s48, 1
        %s296 = scalar_lea.sflag [#allocation4], %s295
        %s297 = sand.u32 %s48, 1
        %s298 = smul.addr %s297, 64
        %s299 = scalar_lea.vmem [#allocation3], %s298
        %p300 = pneg %p61
        %p301 = pneg %p58
        %p302 = scmp.lt.s32.totalorder %s30, 1
        %s303 = scalar_select %p302, %s30, 1
        %p304 = scmp.lt.s32.totalorder %s31, 0
        %s305 = scalar_select %p304, %s31, 0
        %s306 = sadd.s32 %s305, %s303
        %s307 = smul.addr %s306, 8
        %s308 = scalar_lea.vmem %s1, %s307
        %p309 = pneg %p89
        %p310 = pneg %p86
        %p311 = scmp.lt.s32.totalorder %s30, 1
        %s312 = scalar_select %p311, %s30, 1
        %s313 = scalar_lea.vmem %s2, %s312
        %p314 = pneg %p115
        %p315 = pneg %p112
        %p316 = pneg %p136
        %p317 = pneg %p133
        %p318 = pneg %p157
        %p319 = pneg %p154
        %p320 = pneg %p185
        %p321 = pneg %p182
        %s322 = sand.u32 %s172, 1
        %s323 = scalar_lea.sflag [#allocation5], %s322
        %s324 = sand.u32 %s172, 1
        %s325 = smul.addr %s324, 8
        %s326 = scalar_lea.vmem [#allocation6], %s325
        %p327 = pneg %p213
        %p328 = pneg %p210
        %p329 = scmp.lt.s32.totalorder %s30, 1
        %s330 = scalar_select %p329, %s30, 1
        %p331 = scmp.lt.s32.totalorder %s31, 0
        %s332 = scalar_select %p331, %s31, 0
        %s333 = sadd.s32 %s332, %s330
        %s334 = smul.addr %s333, 8
        %s335 = scalar_lea.vmem %s6, %s334
        %s336 = smul.u32 8, %s31
        %p337 = scmp.lt.s32.totalorder %s30, 1
        %s338 = scalar_select %p337, %s30, 1
        %p339 = scmp.lt.s32.totalorder %s31, 0
        %s340 = scalar_select %p339, %s31, 0
        %s341 = sadd.s32 %s340, %s338
        %s342 = smul.addr %s341, 8
        %s343 = scalar_lea.vmem %s1, %s342
        %p344 = scmp.lt.s32.totalorder %s30, 1
        %s345 = scalar_select %p344, %s30, 1
        %s346 = scalar_lea.vmem %s2, %s345
        %p347 = scmp.lt.s32.totalorder %s30, 1
        %s348 = scalar_select %p347, %s30, 1
        %p349 = scmp.lt.s32.totalorder %s31, 0
        %s350 = scalar_select %p349, %s31, 0
        %s351 = sadd.s32 %s350, %s348
        %s352 = smul.addr %s351, 8
        %s353 = scalar_lea.vmem %s6, %s352
        %v354 = vld [vmem:[#allocation2] sm:$0x1]
        %s355 = vtos %v354
        %vm356 = vcmask 64512
        %357 = vst.msk [vmem:[%s326] sm:$0xff] %vm356, 0.0
        %v358 = vld [vmem:[%s289] sm:$0xff]
        %v359 = vld [vmem:[%s289 + $0x8] sm:$0xff]
        %v360 = vld [vmem:[%s289 + $0x10] sm:$0xff]
        %v361 = vld [vmem:[%s289 + $0x18] sm:$0xff]
        %v362 = vld [vmem:[%s289 + $0x20] sm:$0xff]
        %v363 = vld [vmem:[%s289 + $0x28] sm:$0xff]
        %v364 = vld [vmem:[%s289 + $0x30] sm:$0xff]
        %v365 = vld [vmem:[%s289 + $0x38] sm:$0xff]
        %v366 = vld [vmem:[%s3] sm:$0x1]
        %v367 = vld [vmem:[%s326] sm:$0xff]
        %v369 = vperm.slane %v366, 0
        %v371 = vmul.f32 %v358, %v369
        %v372 = vmul.f32 %v359, %v369
        %v373 = vmul.f32 %v360, %v369
        %v374 = vmul.f32 %v361, %v369
        %v375 = vmul.f32 %v362, %v369
        %v376 = vmul.f32 %v363, %v369
        %v377 = vmul.f32 %v364, %v369
        %v378 = vmul.f32 %v365, %v369
        %vm379 = vcmask 261120
        %v380 = vsel %vm379, %v371, 0.0
        %381 = vadd.xlane.f32.xlu0 %v380
        %v382 = vpop.xlane.xlu0 %381
        %v383 = vsel %vm379, %v372, 0.0
        %384 = vadd.xlane.f32.xlu0 %v383
        %v385 = vpop.xlane.xlu0 %384
        %v386 = vsel %vm379, %v373, 0.0
        %387 = vadd.xlane.f32.xlu0 %v386
        %v388 = vpop.xlane.xlu0 %387
        %v389 = vsel %vm379, %v374, 0.0
        %390 = vadd.xlane.f32.xlu0 %v389
        %v391 = vpop.xlane.xlu0 %390
        %v392 = vsel %vm379, %v375, 0.0
        %393 = vadd.xlane.f32.xlu0 %v392
        %v394 = vpop.xlane.xlu0 %393
        %v395 = vsel %vm379, %v376, 0.0
        %396 = vadd.xlane.f32.xlu0 %v395
        %v397 = vpop.xlane.xlu0 %396
        %v398 = vsel %vm379, %v377, 0.0
        %399 = vadd.xlane.f32.xlu0 %v398
        %v400 = vpop.xlane.xlu0 %399
        %v401 = vsel %vm379, %v378, 0.0
        %402 = vadd.xlane.f32.xlu0 %v401
        %v403 = vpop.xlane.xlu0 %402
        %v412 = vlaneseq
        %v413 = vand.u32 %v412, 127
        %v414 = vperm.slane %v382, %v413
        %v415 = vperm.slane %v385, %v413
        %v416 = vperm.slane %v388, %v413
        %v417 = vperm.slane %v391, %v413
        %v418 = vperm.slane %v394, %v413
        %v419 = vperm.slane %v397, %v413
        %v420 = vperm.slane %v400, %v413
        %v421 = vperm.slane %v403, %v413
        %vm422 = vcmask 1041409
        %v423 = vsel %vm422, %v415, %v414
        %vm424 = vcmask 1042434
        %v425 = vsel %vm424, %v416, %v423
        %vm426 = vcmask 1043459
        %v427 = vsel %vm426, %v417, %v425
        %vm428 = vcmask 1044484
        %v429 = vsel %vm428, %v418, %v427
        %vm430 = vcmask 1045509
        %v431 = vsel %vm430, %v419, %v429
        %vm432 = vcmask 1046534
        %v433 = vsel %vm432, %v420, %v431
        %vm434 = vcmask 1047559
        %v435 = vsel %vm434, %v421, %v433
        %v437 = vadd.f32 %v367, %v435
        %438 = vst.msk [vmem:[%s326] sm:$0xff] %vm356, %v437
        %v439 = vld [vmem:[%s343] sm:$0xff]
        %vm440 = vcmp.gt.s32.totalorder %v439, 0
        %v441 = vld [vmem:[%s346] sm:$0x1]
        %vm442 = vcmp.gt.s32.totalorder %v441, 0
        %v443 = vsel %vm440, 1, 0
        %444 = vset.pattern.permute.xlu0 0
        %445 = vperm.xlu0 %444, %v443
        %v446 = vpop.permute.xlu0 %445
        %vm447 = vcmp.eq.s32.totalorder %v446, 1
        %v448 = vsel %vm442, 1, 0
        %v449 = vperm.slane %v448, 0
        %vm450 = vcmp.eq.s32.totalorder %v449, 1
        %vm451 = vmand %vm447, %vm450
        %v452 = vld [vmem:[%s326] sm:$0xff]
        %v453 = vstv %s355
        %v454 = vadd.f32 %v452, %v453
        %v455 = vsel %vm451, %v454, -inf
        %456 = vst.msk [vmem:[%s326] sm:$0xff] %vm356, %v455
        %v457 = vsel %vm356, %v455, -inf
        %458 = vmax.xlane.f32.xlu0 %v457
        %v459 = vpop.xlane.xlu0 %458
        %vm460 = vcmp.eq.f32.partialorder %v455, %v459
        %v461 = vsel %vm460, %v413, 8
        %v462 = vsel %vm356, %v461, 2147483647
        %v463 = vand.u32 %v462, 65535
        %v464 = vshra.s32 %v462, 16
        %v465 = vcvt.s32.f32 %v463
        %v466 = vcvt.s32.f32 %v464
        %467 = vmin.xlane.f32.xlu0 %v466
        %v468 = vpop.xlane.xlu0 %467
        %vm469 = vcmp.eq.f32.partialorder %v466, %v468
        %v470 = vsel %vm469, %v465, inf
        %471 = vmin.xlane.f32.xlu0 %v470
        %v472 = vpop.xlane.xlu0 %471
        %v473 = vcvt.f32.s32 %v472
        %v474 = vcvt.f32.s32 %v468
        %v475 = vshll.u32 %v474, 16
        %v476 = vadd.s32 %v475, %v473
        %vm477 = vcmask 7168
        %478 = vst.msk [vmem:[%s353] sm:$0xff] %vm477, %v476
        %s479 = sand.u32 %s172, 1
        %s480 = scalar_lea.sflag [#allocation5], %s479
        %s481 = sand.u32 %s172, 1
        %s482 = smul.addr %s481, 8
        %s483 = scalar_lea.vmem [#allocation6], %s482
        %p484 = scmp.lt.s32.totalorder %s30, 1
        %s485 = scalar_select %p484, %s30, 1
        %p486 = scmp.lt.s32.totalorder %s31, 0
        %s487 = scalar_select %p486, %s31, 0
        %s488 = sadd.s32 %s487, %s485
        %s489 = smul.addr %s488, 8
        %s490 = scalar_lea.vmem %s6, %s489
        // Predicated region
        $region45: #{tpu_custom_call.1} parent=39 // pred_check
          %p491 = pneg %p182
        $region46: #{tpu_custom_call.1} parent=39 // pred_check_branch
          %493 = sbr.rel (%p491) target = $region48
        $region47: #{tpu_custom_call.1} parent=39 // pred_region
          %495 = vsyncadd %s480, 0
          %s496 = sadd.s32 %s31, %s30
          %s497 = smul.addr %s496, 8
          %s498 = scalar_lea.hbm %s5, %s497
          %s500 = sshll.u32 %s483, 4
          %s501 = int_to_ptr.vmem [resolvable:$true] %s500
          %s502 = sshll.u32 %s498, 4
          %s503 = int_to_ptr.hbm [resolvable:$true] %s502
          %505 = dma.vmem_to_hbm [thread:$0]  %s501, 128, %s503, %s480
        $region48: #{tpu_custom_call.1} parent=39 // pred_fallthru
          _
        // Predicated region
        $region49: #{tpu_custom_call.1} parent=39 // pred_check
          %p506 = pneg %p210
        $region50: #{tpu_custom_call.1} parent=39 // pred_check_branch
          %508 = sbr.rel (%p506) target = $region52
        $region51: #{tpu_custom_call.1} parent=39 // pred_region
          _
        $region52: #{tpu_custom_call.1} parent=39 // pred_fallthru
          _
      $region40: #{tpu_custom_call.1} parent=5 // pred_fallthru
        _
      %p509 = scmp.le.s32.totalorder 2, %s21
      // Predicated region
      $region53: #{tpu_custom_call.1} parent=5 // pred_check
        %p510 = pneg %p509
      $region54: #{tpu_custom_call.1} parent=5 // pred_check_branch
        %512 = sbr.rel (%p510) target = $region56
      $region55: #{tpu_custom_call.1} parent=5 // pred_region
        %s513 = ssub.s32 %s21, 2
        // Predicated region
        $region57: #{tpu_custom_call.1} parent=55 // pred_check
          %p514 = pneg %p188
        $region58: #{tpu_custom_call.1} parent=55 // pred_check_branch
          %516 = sbr.rel (%p514) target = $region60
        $region59: #{tpu_custom_call.1} parent=55 // pred_region
          %s517 = sand.u32 %s173, 1
          %s518 = scalar_lea.sflag [#allocation5], %s517
          %s519 = sand.u32 %s173, 1
          %s520 = smul.addr %s519, 8
          %s521 = scalar_lea.vmem [#allocation6], %s520
          %523 = dma.done %s518, 128
        $region60: #{tpu_custom_call.1} parent=55 // pred_fallthru
          _
        // Predicated region
        $region61: #{tpu_custom_call.1} parent=55 // pred_check
          %p524 = pneg %p216
        $region62: #{tpu_custom_call.1} parent=55 // pred_check_branch
          %526 = sbr.rel (%p524) target = $region64
        $region63: #{tpu_custom_call.1} parent=55 // pred_region
          %p527 = scmp.lt.s32.totalorder %s32, 1
          %s528 = scalar_select %p527, %s32, 1
          %p529 = scmp.lt.s32.totalorder %s33, 0
          %s530 = scalar_select %p529, %s33, 0
          %s531 = sadd.s32 %s530, %s528
          %s532 = smul.addr %s531, 8
          %s533 = scalar_lea.vmem %s6, %s532
        $region64: #{tpu_custom_call.1} parent=55 // pred_fallthru
          _
      $region56: #{tpu_custom_call.1} parent=5 // pred_fallthru
        _
    $region6: #{tpu_custom_call.1} parent=1 // loop_footer
      %s25 = sadd.s32 1, %s21
    $region7: #{tpu_custom_call.1} parent=1 // loop_footer_branch
      %20 = sbr.rel target = $region3
    $region8: #{tpu_custom_call.1} parent=1 // loop_exit
      _
    %534 = vsyncpa [#allocation4], 1
    %s535 = scalar_lea.sflag [#allocation4], 1
    %536 = vsyncpa %s535, 1
    %537 = vsyncpa [#allocation5], 1
    %s538 = scalar_lea.sflag [#allocation5], 1
    %539 = vsyncpa %s538, 1

</llo_original>
